<compile_context>
chip_gen: v7x
topology: tpu7x:2x2x1
jax: 0.10.0
libtpu: 0.0.40
codegen_flags: <defaults>
</compile_context>

<pallas_src>
import jax
import jax.numpy as jnp
from jax.experimental import pallas as pl
from jax.experimental.pallas import tpu as pltpu


# ---------------------------------------------------------------------------
# Pallas kernel
# ---------------------------------------------------------------------------

def _gated_tanh_kernel(x_ref, o_ref):
    """One grid step of GatedTanh.

    x_ref: (Bt, 2, Ct, Lt)  -- x_ref[:, 0] is the 's' half, x_ref[:, 1] the 't' half
    o_ref: (Bt, Ct, Lt)
    """
    x = x_ref[...].astype(jnp.float32)          # (Bt, 2, Ct, Lt)
    s = x[:, 0]                                 # sigmoid-gate half
    t = x[:, 1]                                 # tanh half
    # sigmoid(s) == 0.5 * (tanh(0.5*s) + 1): keeps the transcendental work to
    # two tanh-class EUP ops per element and off the VPU divide path.
    gate = 0.5 * (jnp.tanh(0.5 * s) + 1.0)
    o_ref[...] = (gate * jnp.tanh(t)).astype(o_ref.dtype)


# ---------------------------------------------------------------------------
# Tile selection (byte-budgeted)
# ---------------------------------------------------------------------------

_BLOCK_BUDGET_BYTES = 12 * 1024 * 1024   # per-step (input+output) block bytes
_VMEM_LIMIT_BYTES = 48 * 1024 * 1024     # > defaults, < v7x 64 MiB physical


def _round_down(x, m):
    return max(m, (x // m) * m)


def _choose_tiles(B, half, L, dtype_size, budget=_BLOCK_BUDGET_BYTES):
    """Pick (Bt, Ct, Lt) so that Bt*Ct*Lt*(2 in + 1 out)*dtype <= budget,
    with lane tiles 128-aligned (or full-extent) and channel tiles 8-aligned
    (or full-extent)."""
    bpe = 3 * dtype_size  # 2 input halves + 1 output element per (c, l) point

    # Lane tile: full extent if small, else a 128-aligned tile (the cdiv grid
    # masks the ragged tail block).
    Lt = L if L <= 2048 else 2048

    # Channel tile.
    if half * Lt * bpe <= budget:
        Ct = half                                 # full extent, always legal
    else:
        # Shrink the lane tile only if even 8 sublanes would blow the budget
        # (keeps stores unmasked full-width vst).
        while Lt > 128 and 8 * Lt * bpe > budget:
            Lt = _round_down(Lt // 2, 128)
        Ct = max(8, _round_down(budget // (bpe * Lt), 8))
        Ct = min(Ct, _round_down(half, 8))        # < half here, so 8-aligned

    # Batch fusion: amortize per-step overhead when the per-row slab is tiny.
    row_bytes = Ct * Lt * bpe
    Bt = 1
    if row_bytes < (1 << 20):
        Bt = max(1, min(B, (4 << 20) // max(row_bytes, 1)))
    return Bt, Ct, Lt


# ---------------------------------------------------------------------------
# Wrapper
# ---------------------------------------------------------------------------

def gated_tanh(x):
    """x: (B, C, *spatial) with even C  ->  (B, C//2, *spatial).

    Matches torch: s, t = x.split(C//2, dim=1); y = sigmoid(s) * tanh(t).
    """
    B, C = x.shape[0], x.shape[1]
    assert C % 2 == 0, "GatedTanh requires an even number of channels"
    half = C // 2

    spatial = x.shape[2:]
    L = 1
    for d in spatial:
        L *= d

    # Expose the channel halves as a leading size-2 axis; flatten spatial dims
    # onto the lane axis. Pure metadata reshape for a contiguous (B, C, ...) x.
    xr = x.reshape(B, 2, half, L)

    dtype_size = jnp.dtype(x.dtype).itemsize
    Bt, Ct, Lt = _choose_tiles(B, half, L, dtype_size)

    grid = (pl.cdiv(B, Bt), pl.cdiv(half, Ct), pl.cdiv(L, Lt))

    n_elems = B * half * L
    cost = pl.CostEstimate(
        flops=3 * n_elems,                 # scale/add/mul per output element
        transcendentals=2 * n_elems,       # two tanh-class EUP ops per element
        bytes_accessed=3 * n_elems * dtype_size,
    )

    out = pl.pallas_call(
        _gated_tanh_kernel,
        out_shape=jax.ShapeDtypeStruct((B, half, L), x.dtype),
        grid=grid,
        in_specs=[
            pl.BlockSpec((Bt, 2, Ct, Lt), lambda b, c, l: (b, 0, c, l)),
        ],
        out_specs=pl.BlockSpec((Bt, Ct, Lt), lambda b, c, l: (b, c, l)),
        compiler_params=pltpu.CompilerParams(
            dimension_semantics=("parallel", "parallel", "parallel"),
            vmem_limit_bytes=_VMEM_LIMIT_BYTES,
        ),
        cost_estimate=cost,
    )(xr)

    return out.reshape((B, half) + spatial)


# ---------------------------------------------------------------------------
# Main
# ---------------------------------------------------------------------------

if __name__ == "__main__":
    key = jax.random.PRNGKey(0)
    k1, k2, k3 = jax.random.split(key, 3)

    # Test 1: small NCHW input with even, sublane-aligned channel halves.
    B, C, H, W = 2, 16, 16, 16
    x1 = jax.random.normal(k1, (B, C, H, W), jnp.float32)
    y1 = jax.jit(gated_tanh)(x1)
    jax.block_until_ready(y1)
    assert y1.shape == (B, C // 2, H, W), y1.shape
    ref1 = jax.nn.sigmoid(x1[:, : C // 2]) * jnp.tanh(x1[:, C // 2:])
    assert jnp.allclose(y1, ref1, atol=1e-5, rtol=1e-5), float(
        jnp.max(jnp.abs(y1 - ref1)))

    # Test 2: odd, non-(8,128)-aligned shapes (full-extent blocks).
    x2 = jax.random.normal(k2, (3, 10, 7, 19), jnp.float32)
    y2 = jax.jit(gated_tanh)(x2)
    jax.block_until_ready(y2)
    ref2 = jax.nn.sigmoid(x2[:, :5]) * jnp.tanh(x2[:, 5:])
    assert jnp.allclose(y2, ref2, atol=1e-5, rtol=1e-5), float(
        jnp.max(jnp.abs(y2 - ref2)))

    # Test 3: bf16 input (f32 compute in-kernel, cast back on store).
    x3 = jax.random.normal(k3, (2, 16, 256), jnp.bfloat16)
    y3 = jax.jit(gated_tanh)(x3)
    jax.block_until_ready(y3)
    ref3 = (jax.nn.sigmoid(x3[:, :8].astype(jnp.float32))
            * jnp.tanh(x3[:, 8:].astype(jnp.float32)))
    assert jnp.allclose(y3.astype(jnp.float32), ref3, atol=2e-2, rtol=2e-2)

    print("KERNEL_OK")
</pallas_src>

<mosaic_0001>
module attributes {stable_mosaic.version = 11 : i64} {
  func.func @_gated_tanh_kernel(%arg0: i32, %arg1: i32, %arg2: i32, %arg3: memref<2x2x8x256xf32, #tpu.memory_space<vmem>>, %arg4: memref<2x8x256xf32, #tpu.memory_space<vmem>>) attributes {dimension_semantics = [#tpu.dimension_semantics<parallel>, #tpu.dimension_semantics<parallel>, #tpu.dimension_semantics<parallel>], iteration_bounds = array<i64: 1, 1, 1>, scalar_prefetch = 0 : i64, scratch_operands = 0 : i64, tpu.core_type = #tpu.core_type<tc>, window_params = [{transform_indices = @transform_0, window_bounds = array<i64: 2, 2, 8, 256>}, {transform_indices = @transform_1, window_bounds = array<i64: 2, 8, 256>}]} {
    %c0 = arith.constant 0 : index
    %c0_0 = arith.constant 0 : index
    %c0_1 = arith.constant 0 : index
    %c0_2 = arith.constant 0 : index
    %0 = vector.load %arg3[%c0, %c0_0, %c0_1, %c0_2] : memref<2x2x8x256xf32, #tpu.memory_space<vmem>>, vector<2x2x8x256xf32>
    %1 = vector.extract_strided_slice %0 {offsets = [0, 0, 0, 0], sizes = [2, 1, 8, 256], strides = [1, 1, 1, 1]} : vector<2x2x8x256xf32> to vector<2x1x8x256xf32>
    %2 = vector.shape_cast %1 : vector<2x1x8x256xf32> to vector<2x8x256xf32>
    %3 = vector.extract_strided_slice %0 {offsets = [0, 1, 0, 0], sizes = [2, 1, 8, 256], strides = [1, 1, 1, 1]} : vector<2x2x8x256xf32> to vector<2x1x8x256xf32>
    %4 = vector.shape_cast %3 : vector<2x1x8x256xf32> to vector<2x8x256xf32>
    %cst = arith.constant 5.000000e-01 : f32
    %5 = vector.broadcast %cst : f32 to vector<2x8x256xf32>
    %6 = arith.mulf %5, %2 : vector<2x8x256xf32>
    %7 = math.tanh %6 : vector<2x8x256xf32>
    %cst_3 = arith.constant 1.000000e+00 : f32
    %8 = vector.broadcast %cst_3 : f32 to vector<2x8x256xf32>
    %9 = arith.addf %7, %8 : vector<2x8x256xf32>
    %cst_4 = arith.constant 5.000000e-01 : f32
    %10 = vector.broadcast %cst_4 : f32 to vector<2x8x256xf32>
    %11 = arith.mulf %10, %9 : vector<2x8x256xf32>
    %12 = math.tanh %4 : vector<2x8x256xf32>
    %13 = arith.mulf %11, %12 : vector<2x8x256xf32>
    %c0_5 = arith.constant 0 : index
    %c0_6 = arith.constant 0 : index
    %c0_7 = arith.constant 0 : index
    %14 = vector.load %arg4[%c0_5, %c0_6, %c0_7] : memref<2x8x256xf32, #tpu.memory_space<vmem>>, vector<2x8x256xf32>
    tpu.vector_store %arg4[%c0_5, %c0_6, %c0_7], %13 {strides = array<i32>} : memref<2x8x256xf32, #tpu.memory_space<vmem>>, vector<2x8x256xf32>,
    return
  }
  func.func @transform_0(%arg0: i32, %arg1: i32, %arg2: i32) -> (i32, i32, i32, i32) {
    %c0_i32 = arith.constant 0 : i32
    %c0_i32_0 = arith.constant 0 : i32
    return %arg0, %c0_i32, %arg1, %arg2 : i32, i32, i32, i32
  }
  func.func @transform_1(%arg0: i32, %arg1: i32, %arg2: i32) -> (i32, i32, i32) {
    %c0_i32 = arith.constant 0 : i32
    return %arg0, %arg1, %arg2 : i32, i32, i32
  }
}

</mosaic_0001>

<llo_original>
// kernel: gated_tanh.1
$region0: #{gated_tanh.1}
  #allocation0 [shape = 'u32[]', space=smem, size = 0x4, offset = 0x4, fixed_abs, tag = 'smem constant byte address 0x4 - core index']
  #allocation1 [shape = 'u32[144,128]{1,0:T(1,128)}', space=vmem, size = 0x12000, scoped, tag = 'internal scratch']
  %s0 = inlined_call_operand.vmem [shape: f32[2,2,8,256], index: 0, kind: input, shape index: {}]
  %s1 = inlined_call_operand.vmem [shape: f32[2,8,256], index: 1, kind: output, shape index: {}]
  %s2 = sld [smem:[#allocation0]]
  $region14: #{gated_tanh.1} parent=0
    _
  %s4 = ssub.s32 1, %s2
  %s5 = scalar_select 0, %s4, %s2
  // Predicated region
  $region2: #{gated_tanh.1} parent=0 // pred_check
    _
  $region3: #{gated_tanh.1} parent=0 // pred_check_branch
    %7 = sbr.rel (0) target = $region5
  $region4: #{gated_tanh.1} parent=0 // pred_region
    _
  $region5: #{gated_tanh.1} parent=0 // pred_fallthru
    _
  %v8 = vld [vmem:[%s0] sm:$0xff]
  %v9 = vld [vmem:[%s0 + $0x8] sm:$0xff]
  %v10 = vld [vmem:[%s0 + $0x10] sm:$0xff]
  %v11 = vld [vmem:[%s0 + $0x18] sm:$0xff]
  %v12 = vld [vmem:[%s0 + $0x20] sm:$0xff]
  %v13 = vld [vmem:[%s0 + $0x28] sm:$0xff]
  %v14 = vld [vmem:[%s0 + $0x30] sm:$0xff]
  %v15 = vld [vmem:[%s0 + $0x38] sm:$0xff]
  %v16 = vmul.f32 %v8, 0.5
  %v17 = vmul.f32 %v9, 0.5
  %v18 = vmul.f32 %v12, 0.5
  %v19 = vmul.f32 %v13, 0.5
  %v20 = vtanh.pop %v16
  %v21 = vtanh.pop %v17
  %v22 = vtanh.pop %v18
  %v23 = vtanh.pop %v19
  %v24 = vadd.f32 %v20, 1.0
  %v25 = vadd.f32 %v21, 1.0
  %v26 = vadd.f32 %v22, 1.0
  %v27 = vadd.f32 %v23, 1.0
  %v28 = vmul.f32 %v24, 0.5
  %v29 = vmul.f32 %v25, 0.5
  %v30 = vmul.f32 %v26, 0.5
  %v31 = vmul.f32 %v27, 0.5
  %v32 = vtanh.pop %v10
  %v33 = vtanh.pop %v11
  %v34 = vtanh.pop %v14
  %v35 = vtanh.pop %v15
  %v36 = vmul.f32 %v28, %v32
  %v37 = vmul.f32 %v29, %v33
  %v38 = vmul.f32 %v30, %v34
  %v39 = vmul.f32 %v31, %v35
  %40 = vst [vmem:[%s1] sm:$0xff] %v36
  %41 = vst [vmem:[%s1 + $0x8] sm:$0xff] %v37
  %42 = vst [vmem:[%s1 + $0x10] sm:$0xff] %v38
  %43 = vst [vmem:[%s1 + $0x18] sm:$0xff] %v39
  // Predicated region
  $region6: #{gated_tanh.1} parent=0 // pred_check
    _
  $region7: #{gated_tanh.1} parent=0 // pred_check_branch
    %45 = sbr.rel (0) target = $region9
  $region8: #{gated_tanh.1} parent=0 // pred_region
    _
  $region9: #{gated_tanh.1} parent=0 // pred_fallthru
    _
  // Predicated region
  $region10: #{gated_tanh.1} parent=0 // pred_check
    _
  $region11: #{gated_tanh.1} parent=0 // pred_check_branch
    %47 = sbr.rel (0) target = $region13
  $region12: #{gated_tanh.1} parent=0 // pred_region
    _
  $region13: #{gated_tanh.1} parent=0 // pred_fallthru
    _

</llo_original>
